<compile_context>
chip_gen: v7x
topology: tpu7x:2x2x1
jax: 0.10.0
libtpu: 0.0.40
codegen_flags: <defaults>
</compile_context>

<pallas_src>
import functools
import math

import jax
import jax.numpy as jnp
from jax.experimental import pallas as pl
from jax.experimental.pallas import tpu as pltpu

_LANE = 128      # vreg lane width  -> pad hidden/output feature dims to this
_SUBLANE = 8     # vreg sublane     -> pad batch dim to this


def _round_up(n, m):
    return ((n + m - 1) // m) * m


def _cdiv(a, b):
    return -(-a // b)


_VMEM_CAP_CACHE = [None]


def _vmem_capacity_bytes():
    """Per-TensorCore VMEM capacity for the current TPU generation."""
    if _VMEM_CAP_CACHE[0] is None:
        try:
            _VMEM_CAP_CACHE[0] = int(pltpu.get_tpu_info().vmem_capacity_bytes)
        except Exception:
            # Conservative fallback = v7x per-TC VMEM.
            _VMEM_CAP_CACHE[0] = 64 * 2**20
    return _VMEM_CAP_CACHE[0]


def _mlp_fused_kernel(*refs, n_layers):
    """Whole MLP in one kernel body.

    refs = (x_ref, w0_ref, b0_ref, ..., w_{L-1}_ref, b_{L-1}_ref, o_ref)

    x_ref : (TB, in_dim)   VMEM tile (true input width, no lane padding)
    w_l   : (Dl, Dl1_p)    VMEM resident weight (hidden dims lane-padded)
    b_l   : (1, Dl1_p)     VMEM resident bias row (f32)
    o_ref : (TB, out_cols) VMEM tile; out_cols is either the lane-padded or
                           the true output width -- the store slices to fit.

    Intermediate activations stay in registers; ReLU after every layer except
    the last, matching the PyTorch nn.Sequential construction. Matmuls run in
    the weights' dtype (f32 or bf16) with f32 accumulation; bias add + ReLU
    are always f32.
    """
    x_ref = refs[0]
    o_ref = refs[-1]
    wb_refs = refs[1:-1]

    y = x_ref[...].astype(jnp.float32)
    for layer in range(n_layers):
        w = wb_refs[2 * layer][...]
        b = wb_refs[2 * layer + 1][...]
        y = jnp.dot(y.astype(w.dtype), w, preferred_element_type=jnp.float32)
        y = y + b.astype(jnp.float32)
        if layer < n_layers - 1:
            y = jnp.maximum(y, 0.0)
    # Store only as many columns as the output block carries (narrow or padded).
    o_ref[...] = y[:, : o_ref.shape[-1]].astype(o_ref.dtype)


def _mlp_fused_impl(x, flat_params, out_dim, batch_tile):
    """Fused MLP forward.  Intended to be called through the jitted wrapper.

    x           : (B, in_dim) float32, unpadded
    flat_params : [w0_p, b0_p, w1_p, b1_p, ...]; hidden/output dims lane-padded,
                  layer-0 input dim kept at its true width, biases in f32
    out_dim     : true (unpadded) output feature count
    batch_tile  : target rows per grid step when B is large
    """
    B, in_dim = x.shape
    n_layers = len(flat_params) // 2
    dout_p = flat_params[-2].shape[1]
    itemsize = jnp.dtype(x.dtype).itemsize

    # ---- adaptive batch tiling -----------------------------------------
    if B <= batch_tile:
        num_tiles = 1
        tb = _round_up(B, _SUBLANE)
    else:
        num_tiles = _cdiv(B, batch_tile)
        if num_tiles % 2:       # even tile count: balanced across v7x's 2 TCs
            num_tiles += 1
        tb = _round_up(_cdiv(B, num_tiles), _SUBLANE)
    b_pad = tb * num_tiles

    # Pad on the batch axis only; feature dims keep their true width.
    if b_pad != B:
        x_p = jnp.zeros((b_pad, in_dim), x.dtype).at[:B].set(x)
    else:
        x_p = x

    # Large (HBM-write-bound) batches: write only the true output columns.
    narrow_out = num_tiles > 1
    out_cols = out_dim if narrow_out else dout_p

    # ---- VMEM budget, per generation ------------------------------------
    resident_bytes = sum(int(a.size) * jnp.dtype(a.dtype).itemsize
                         for a in flat_params)            # Buffered(1) -> 1x
    io_bufs = 2 if num_tiles > 1 else 1                    # double-buffered I/O
    io_bytes = io_bufs * tb * (in_dim + out_cols) * itemsize
    vmem_needed = resident_bytes + io_bytes
    cap = _vmem_capacity_bytes()
    if vmem_needed > int(0.85 * cap):
        # TODO(synk): fall back to a streamed-weight path (pltpu.emit_pipeline
        # over layers / K) instead of requiring all weights VMEM-resident.
        raise ValueError(
            f"Fused MLP needs ~{vmem_needed / 2**20:.1f} MiB VMEM "
            f"(weights {resident_bytes / 2**20:.1f} MiB + tiles) but only "
            f"{cap / 2**20:.0f} MiB is available on this TPU generation.")
    vmem_limit = int(min(cap, max(int(1.5 * vmem_needed), 32 * 2**20)))

    kernel = functools.partial(_mlp_fused_kernel, n_layers=n_layers)
    out_shape = jax.ShapeDtypeStruct((b_pad, out_cols), x.dtype)

    if num_tiles == 1:
        # Single block: no grid, full-extent default BlockSpecs (everything in
        # VMEM), no pipeline-stage overhead, lane-dense padded output write.
        out_p = pl.pallas_call(
            kernel,
            out_shape=out_shape,
            compiler_params=pltpu.CompilerParams(vmem_limit_bytes=vmem_limit),
        )(x_p, *flat_params)
    else:
        # Batch-tiled: x/out streamed by tile; weights/biases grid-invariant
        # (constant index_map) and single-buffered via Buffered(1).
        in_specs = [pl.BlockSpec((tb, in_dim), lambda i: (i, 0))]
        for a in flat_params:
            in_specs.append(
                pl.BlockSpec(a.shape, lambda i: (0, 0),
                             pipeline_mode=pl.Buffered(1)))
        out_spec = pl.BlockSpec((tb, out_cols), lambda i: (i, 0))

        out_p = pl.pallas_call(
            kernel,
            out_shape=out_shape,
            grid=(num_tiles,),
            in_specs=in_specs,
            out_specs=out_spec,
            compiler_params=pltpu.CompilerParams(
                dimension_semantics=("parallel",),
                vmem_limit_bytes=vmem_limit,
            ),
        )(x_p, *flat_params)

    return out_p[:B, :out_dim]


# jit the whole wrapper: pad + pallas_call + slice become one dispatch.
_mlp_fused = jax.jit(_mlp_fused_impl, static_argnames=("out_dim", "batch_tile"))


class MLPPallas:
    """JAX/Pallas equivalent of CIC.model.MLP (act_fn=ReLU, batch_norm=False).

    Layers: Linear(in->h1)+ReLU, ..., Linear(h_last->out) (no final act),
    matching the PyTorch nn.Sequential construction.

    weight_dtype=jnp.bfloat16 enables the v6e/v7x MXU lever (halved weight
    bytes, native-rate matmul, f32 accumulation); default f32 keeps exact
    parity with the PyTorch reference.
    """

    def __init__(self, in_dim, out_dim, hidden_dims, key, *,
                 batch_tile=2048, weight_dtype=jnp.float32):
        dims = [in_dim] + list(hidden_dims) + [out_dim]
        self.in_dim = in_dim
        self.out_dim = out_dim
        self.batch_tile = batch_tile
        self.params = []        # unpadded f32 (for the pure-JAX reference)
        self.flat_padded = []   # [w0_p, b0_p, w1_p, b1_p, ...] fed to kernel
        for i in range(1, len(dims)):
            d_in, d_out = dims[i - 1], dims[i]
            key, wk, bk = jax.random.split(key, 3)
            bound = 1.0 / math.sqrt(d_in)   # PyTorch nn.Linear default init
            w = jax.random.uniform(wk, (d_in, d_out), jnp.float32, -bound, bound)
            b = jax.random.uniform(bk, (1, d_out), jnp.float32, -bound, bound)
            self.params.append((w, b))

            # Layer 0 keeps its true input width (x is not lane-padded);
            # all hidden/output widths are lane-padded so intermediates are
            # lane-dense.  Zero padding is semantics-preserving (padded output
            # columns stay 0 through bias add and ReLU).
            din_p = d_in if i == 1 else _round_up(d_in, _LANE)
            dout_p = _round_up(d_out, _LANE)
            w_p = (jnp.zeros((din_p, dout_p), weight_dtype)
                   .at[:d_in, :d_out].set(w.astype(weight_dtype)))
            # Biases stay f32 regardless of weight dtype (tiny, keeps accuracy).
            b_p = jnp.zeros((1, dout_p), jnp.float32).at[:, :d_out].set(b)
            self.flat_padded.extend((w_p, b_p))
        # TODO(synk): batch_norm=True path (nn.BatchNorm1d) not implemented; the
        # default constructor arg is False so forward semantics match exactly.

    def __call__(self, x):
        return _mlp_fused(x, self.flat_padded, out_dim=self.out_dim,
                          batch_tile=self.batch_tile)


def mlp_reference(x, params):
    """Pure-JAX reference for correctness checking (unpadded f32 params)."""
    n = len(params)
    for idx, (w, b) in enumerate(params):
        x = x @ w + b[0]
        if idx < n - 1:
            x = jnp.maximum(x, 0.0)
    return x


if __name__ == "__main__":
    key = jax.random.PRNGKey(0)
    key, pkey, xkey, xkey2 = jax.random.split(key, 4)

    batch, in_dim, out_dim = 8, 32, 16
    hidden_dims = [64, 64]

    # Small batch_tile in the demo so the batch-tiled path is exercised with a
    # modest array; production default is 2048.
    model = MLPPallas(in_dim, out_dim, hidden_dims, pkey, batch_tile=512)

    # Small batch -> single-block (no-grid) fused kernel path.
    x = jax.random.normal(xkey, (batch, in_dim), dtype=jnp.float32)
    out = jax.block_until_ready(model(x))
    ref = mlp_reference(x, model.params)
    assert out.shape == (batch, out_dim)
    assert jnp.allclose(out, ref, atol=1e-5, rtol=1e-5), \
        "mismatch vs reference (small batch)"

    # Larger, non-multiple batch -> batch-tiled path: even grid, Buffered(1)
    # resident weights, narrow (true out_dim) output blocks.
    big_batch = 1030
    x_big = jax.random.normal(xkey2, (big_batch, in_dim), dtype=jnp.float32)
    out_big = jax.block_until_ready(model(x_big))
    ref_big = mlp_reference(x_big, model.params)
    assert out_big.shape == (big_batch, out_dim)
    assert jnp.allclose(out_big, ref_big, atol=1e-4, rtol=1e-4), \
        "mismatch vs reference (big batch)"

    # bf16-weight variant (v6e/v7x MXU lever): f32 accumulation, relaxed tol.
    model_bf16 = MLPPallas(in_dim, out_dim, hidden_dims, pkey,
                           batch_tile=512, weight_dtype=jnp.bfloat16)
    out_bf16 = jax.block_until_ready(model_bf16(x))
    ref_bf16 = mlp_reference(x, model_bf16.params)
    assert out_bf16.shape == (batch, out_dim)
    assert jnp.allclose(out_bf16, ref_bf16, atol=5e-2, rtol=5e-2), \
        "mismatch vs reference (bf16 weights)"

    print("KERNEL_OK")
</pallas_src>

<mosaic_0001>
module attributes {stable_mosaic.version = 11 : i64} {
  func.func @_mlp_fused_kernel(%arg0: memref<8x32xf32, #tpu.memory_space<vmem>>, %arg1: memref<32x128xf32, #tpu.memory_space<vmem>>, %arg2: memref<1x128xf32, #tpu.memory_space<vmem>>, %arg3: memref<128x128xf32, #tpu.memory_space<vmem>>, %arg4: memref<1x128xf32, #tpu.memory_space<vmem>>, %arg5: memref<128x128xf32, #tpu.memory_space<vmem>>, %arg6: memref<1x128xf32, #tpu.memory_space<vmem>>, %arg7: memref<8x128xf32, #tpu.memory_space<vmem>>) attributes {dimension_semantics = [], scalar_prefetch = 0 : i64, scratch_operands = 0 : i64, tpu.core_type = #tpu.core_type<tc>} {
    %c0 = arith.constant 0 : index
    %c0_0 = arith.constant 0 : index
    %0 = vector.load %arg0[%c0, %c0_0] : memref<8x32xf32, #tpu.memory_space<vmem>>, vector<8x32xf32>
    %c0_1 = arith.constant 0 : index
    %c0_2 = arith.constant 0 : index
    %1 = vector.load %arg1[%c0_1, %c0_2] : memref<32x128xf32, #tpu.memory_space<vmem>>, vector<32x128xf32>
    %c0_3 = arith.constant 0 : index
    %c0_4 = arith.constant 0 : index
    %2 = vector.load %arg2[%c0_3, %c0_4] : memref<1x128xf32, #tpu.memory_space<vmem>>, vector<1x128xf32>
    %cst = arith.constant dense<0.000000e+00> : vector<8x128xf32>
    %3 = tpu.matmul %0, %1, %cst {dimension_numbers = #tpu.dot_dimension_numbers<[1], [0], [0], [1], [0, 0, 1, 1], [], []>} : vector<8x32xf32>, vector<32x128xf32>, vector<8x128xf32> -> vector<8x128xf32>
    %4 = vector.broadcast %2 : vector<1x128xf32> to vector<8x128xf32>
    %5 = arith.addf %3, %4 : vector<8x128xf32>
    %cst_5 = arith.constant 0.000000e+00 : f32
    %6 = vector.broadcast %cst_5 : f32 to vector<8x128xf32>
    %7 = arith.maximumf %5, %6 : vector<8x128xf32>
    %c0_6 = arith.constant 0 : index
    %c0_7 = arith.constant 0 : index
    %8 = vector.load %arg3[%c0_6, %c0_7] : memref<128x128xf32, #tpu.memory_space<vmem>>, vector<128x128xf32>
    %c0_8 = arith.constant 0 : index
    %c0_9 = arith.constant 0 : index
    %9 = vector.load %arg4[%c0_8, %c0_9] : memref<1x128xf32, #tpu.memory_space<vmem>>, vector<1x128xf32>
    %cst_10 = arith.constant dense<0.000000e+00> : vector<8x128xf32>
    %10 = tpu.matmul %7, %8, %cst_10 {dimension_numbers = #tpu.dot_dimension_numbers<[1], [0], [0], [1], [0, 0, 1, 1], [], []>} : vector<8x128xf32>, vector<128x128xf32>, vector<8x128xf32> -> vector<8x128xf32>
    %11 = vector.broadcast %9 : vector<1x128xf32> to vector<8x128xf32>
    %12 = arith.addf %10, %11 : vector<8x128xf32>
    %cst_11 = arith.constant 0.000000e+00 : f32
    %13 = vector.broadcast %cst_11 : f32 to vector<8x128xf32>
    %14 = arith.maximumf %12, %13 : vector<8x128xf32>
    %c0_12 = arith.constant 0 : index
    %c0_13 = arith.constant 0 : index
    %15 = vector.load %arg5[%c0_12, %c0_13] : memref<128x128xf32, #tpu.memory_space<vmem>>, vector<128x128xf32>
    %c0_14 = arith.constant 0 : index
    %c0_15 = arith.constant 0 : index
    %16 = vector.load %arg6[%c0_14, %c0_15] : memref<1x128xf32, #tpu.memory_space<vmem>>, vector<1x128xf32>
    %cst_16 = arith.constant dense<0.000000e+00> : vector<8x128xf32>
    %17 = tpu.matmul %14, %15, %cst_16 {dimension_numbers = #tpu.dot_dimension_numbers<[1], [0], [0], [1], [0, 0, 1, 1], [], []>} : vector<8x128xf32>, vector<128x128xf32>, vector<8x128xf32> -> vector<8x128xf32>
    %18 = vector.broadcast %16 : vector<1x128xf32> to vector<8x128xf32>
    %19 = arith.addf %17, %18 : vector<8x128xf32>
    %c0_17 = arith.constant 0 : index
    %c0_18 = arith.constant 0 : index
    %20 = vector.load %arg7[%c0_17, %c0_18] : memref<8x128xf32, #tpu.memory_space<vmem>>, vector<8x128xf32>
    tpu.vector_store %arg7[%c0_17, %c0_18], %19 {strides = array<i32>} : memref<8x128xf32, #tpu.memory_space<vmem>>, vector<8x128xf32>,
    return
  }
}

</mosaic_0001>

<llo_original>
// kernel: _mlp_fused_impl.1
$region0: #{_mlp_fused_impl.1}
  #allocation0 [shape = 'u32[]', space=smem, size = 0x4, offset = 0x4, fixed_abs, tag = 'smem constant byte address 0x4 - core index']
  #allocation1 [shape = 'u32[144,128]{1,0:T(1,128)}', space=vmem, size = 0x12000, scoped, tag = 'internal scratch']
  %s0 = inlined_call_operand.hbm [shape: f32[8,32], index: 0, kind: input, shape index: {}]
  %s1 = inlined_call_operand.hbm [shape: f32[32,128], index: 1, kind: input, shape index: {}]
  %s2 = inlined_call_operand.vmem [shape: f32[1,128], index: 2, kind: input, shape index: {}]
  %s3 = inlined_call_operand.hbm [shape: f32[128,128], index: 3, kind: input, shape index: {}]
  %s4 = inlined_call_operand.vmem [shape: f32[1,128], index: 4, kind: input, shape index: {}]
  %s5 = inlined_call_operand.hbm [shape: f32[128,128], index: 5, kind: input, shape index: {}]
  %s6 = inlined_call_operand.vmem [shape: f32[1,128], index: 6, kind: input, shape index: {}]
  %s7 = inlined_call_operand.hbm [shape: f32[8,128], index: 7, kind: output, shape index: {}]
  %s8 = sld [smem:[#allocation0]]
  $region54: #{_mlp_fused_impl.1} parent=0
    _
  %s10 = ssub.s32 1, %s8
  %s11 = scalar_select 0, %s10, %s8
  $region1: #{_mlp_fused_impl.1} parent=0
    #allocation2 [shape = 'u8[4096]{0}', space=vmem, size = 0x1000, scoped, tag = 'input window, operand 0, single buffered']
    #allocation3 [shape = 's32[1]{0}', space=sflag, size = 0x4, scoped, tag = 'scoped memory for _mlp_fused_impl.1']
    #allocation4 [shape = 's32[1]{0}', space=sflag, size = 0x4, scoped, tag = 'scoped memory for _mlp_fused_impl.1']
    #allocation5 [shape = 'u8[16384]{0}', space=vmem, size = 0x4000, scoped, tag = 'input window, operand 1, single buffered']
    #allocation6 [shape = 's32[1]{0}', space=sflag, size = 0x4, scoped, tag = 'scoped memory for _mlp_fused_impl.1']
    #allocation7 [shape = 'u8[65536]{0}', space=vmem, size = 0x10000, scoped, tag = 'input window, operand 3, single buffered']
    #allocation8 [shape = 'u8[65536]{0}', space=vmem, size = 0x10000, scoped, tag = 'input window, operand 5, single buffered']
    #allocation9 [shape = 's32[1]{0}', space=sflag, size = 0x4, scoped, tag = 'scoped memory for _mlp_fused_impl.1']
    #allocation10 [shape = 'u8[4096]{0}', space=vmem, size = 0x1000, scoped, tag = 'output window, operand 0, single buffered']
    %12 = vsyncpa [#allocation3], 0
    %13 = vsyncpa [#allocation6], 0
    %14 = vsyncpa [#allocation9], 0
    %15 = vsyncpa [#allocation4], 0
    // Predicated region
    $region2: #{_mlp_fused_impl.1} parent=1 // pred_check
      _
    $region3: #{_mlp_fused_impl.1} parent=1 // pred_check_branch
      %17 = sbr.rel (0) target = $region5
    $region4: #{_mlp_fused_impl.1} parent=1 // pred_region
      %s19 = ssub.s32 128, 128
      %20 = vsyncadd [#allocation3], %s19
      %s22 = sshll.u32 [#allocation2], 4
      %s23 = int_to_ptr.vmem [resolvable:$true] %s22
      %25 = dma.hbm_to_vmem [thread:$0]  %s0, 128, %s23, [#allocation3]
    $region5: #{_mlp_fused_impl.1} parent=1 // pred_fallthru
      _
    // Predicated region
    $region6: #{_mlp_fused_impl.1} parent=1 // pred_check
      _
    $region7: #{_mlp_fused_impl.1} parent=1 // pred_check_branch
      %27 = sbr.rel (0) target = $region9
    $region8: #{_mlp_fused_impl.1} parent=1 // pred_region
      %s29 = ssub.s32 512, 512
      %30 = vsyncadd [#allocation6], %s29
      %s31 = sshll.u32 [#allocation5], 4
      %s32 = int_to_ptr.vmem [resolvable:$true] %s31
      %37 = dma.hbm_to_vmem [thread:$0]  %s1, 512, %s32, [#allocation6], 128, 128, 8
    $region9: #{_mlp_fused_impl.1} parent=1 // pred_fallthru
      _
    // Predicated region
    $region10: #{_mlp_fused_impl.1} parent=1 // pred_check
      _
    $region11: #{_mlp_fused_impl.1} parent=1 // pred_check_branch
      %39 = sbr.rel (0) target = $region13
    $region12: #{_mlp_fused_impl.1} parent=1 // pred_region
      _
    $region13: #{_mlp_fused_impl.1} parent=1 // pred_fallthru
      _
    // Predicated region
    $region14: #{_mlp_fused_impl.1} parent=1 // pred_check
      _
    $region15: #{_mlp_fused_impl.1} parent=1 // pred_check_branch
      %41 = sbr.rel (0) target = $region17
    $region16: #{_mlp_fused_impl.1} parent=1 // pred_region
      %s43 = ssub.s32 2048, 2048
      %44 = vsyncadd [#allocation6], %s43
      %s45 = sshll.u32 [#allocation7], 4
      %s46 = int_to_ptr.vmem [resolvable:$true] %s45
      %51 = dma.hbm_to_vmem [thread:$0]  %s3, 2048, %s46, [#allocation6], 128, 128, 8
    $region17: #{_mlp_fused_impl.1} parent=1 // pred_fallthru
      _
    // Predicated region
    $region18: #{_mlp_fused_impl.1} parent=1 // pred_check
      _
    $region19: #{_mlp_fused_impl.1} parent=1 // pred_check_branch
      %53 = sbr.rel (0) target = $region21
    $region20: #{_mlp_fused_impl.1} parent=1 // pred_region
      _
    $region21: #{_mlp_fused_impl.1} parent=1 // pred_fallthru
      _
    // Predicated region
    $region22: #{_mlp_fused_impl.1} parent=1 // pred_check
      _
    $region23: #{_mlp_fused_impl.1} parent=1 // pred_check_branch
      %55 = sbr.rel (0) target = $region25
    $region24: #{_mlp_fused_impl.1} parent=1 // pred_region
      %s57 = ssub.s32 2048, 2048
      %58 = vsyncadd [#allocation9], %s57
      %s59 = sshll.u32 [#allocation8], 4
      %s60 = int_to_ptr.vmem [resolvable:$true] %s59
      %65 = dma.hbm_to_vmem [thread:$0]  %s5, 2048, %s60, [#allocation9], 128, 128, 8
    $region25: #{_mlp_fused_impl.1} parent=1 // pred_fallthru
      _
    // Predicated region
    $region26: #{_mlp_fused_impl.1} parent=1 // pred_check
      _
    $region27: #{_mlp_fused_impl.1} parent=1 // pred_check_branch
      %67 = sbr.rel (0) target = $region29
    $region28: #{_mlp_fused_impl.1} parent=1 // pred_region
      _
    $region29: #{_mlp_fused_impl.1} parent=1 // pred_fallthru
      _
    // Predicated region
    $region30: #{_mlp_fused_impl.1} parent=1 // pred_check
      _
    $region31: #{_mlp_fused_impl.1} parent=1 // pred_check_branch
      %69 = sbr.rel (0) target = $region33
    $region32: #{_mlp_fused_impl.1} parent=1 // pred_region
      %70 = dma.done [#allocation3], 128
    $region33: #{_mlp_fused_impl.1} parent=1 // pred_fallthru
      _
    // Predicated region
    $region34: #{_mlp_fused_impl.1} parent=1 // pred_check
      _
    $region35: #{_mlp_fused_impl.1} parent=1 // pred_check_branch
      %72 = sbr.rel (0) target = $region37
    $region36: #{_mlp_fused_impl.1} parent=1 // pred_region
      %73 = dma.done [#allocation6], 512
    $region37: #{_mlp_fused_impl.1} parent=1 // pred_fallthru
      _
    // Predicated region
    $region38: #{_mlp_fused_impl.1} parent=1 // pred_check
      _
    $region39: #{_mlp_fused_impl.1} parent=1 // pred_check_branch
      %75 = sbr.rel (0) target = $region41
    $region40: #{_mlp_fused_impl.1} parent=1 // pred_region
      %76 = dma.done [#allocation6], 2048
    $region41: #{_mlp_fused_impl.1} parent=1 // pred_fallthru
      _
    // Predicated region
    $region42: #{_mlp_fused_impl.1} parent=1 // pred_check
      _
    $region43: #{_mlp_fused_impl.1} parent=1 // pred_check_branch
      %78 = sbr.rel (0) target = $region45
    $region44: #{_mlp_fused_impl.1} parent=1 // pred_region
      %79 = dma.done [#allocation9], 2048
    $region45: #{_mlp_fused_impl.1} parent=1 // pred_fallthru
      _
    %v80 = vld [vmem:[#allocation2] sm:$0xff]
    %v81 = vld [vmem:[#allocation5] sm:$0xff]
    %v82 = vld [vmem:[#allocation5 + $0x8] sm:$0xff]
    %v83 = vld [vmem:[#allocation5 + $0x10] sm:$0xff]
    %v84 = vld [vmem:[#allocation5 + $0x18] sm:$0xff]
    %v85 = vld [vmem:[%s2] sm:$0x1]
    %v87 = vlaneseq
    %v88 = vshrl.u32 %v87, 7
    %v89 = vsub.s32 0, %v88
    %v90 = vrot.slane %v85, %v89
    %vm92 = vcmask 261120
    %v94 = vsel %vm92, %v80, 0
    %96 = vmatprep.subr.mxu0 0.0
    %97 = vmatpush1.msra.mxu0 %v81
    %98 = vmatprep.subr.mxu0 0.0
    %99 = vmatpush1.msra.mxu0 %v82
    %100 = vmatprep.subr.mxu0 0.0
    %101 = vmatpush1.msra.mxu0 %v83
    %102 = vmatprep.subr.mxu0 0.0
    %103 = vmatpush1.msra.mxu0 %v84
    %104 = vmatprep.subr.mxu0 0.0
    %105 = vmatpush1.msra.mxu0 0.0
    %106 = vmatprep.subr.mxu0 0.0
    %107 = vmatpush1.msra.mxu0 0.0
    %108 = vmatprep.subr.mxu0 0.0
    %109 = vmatpush1.msra.mxu0 0.0
    %110 = vmatprep.subr.mxu0 0.0
    %111 = vmatpush1.msra.mxu0 0.0
    %112 = vmatprep.subr.mxu0 0.0
    %113 = vmatpush1.msra.mxu0 0.0
    %114 = vmatprep.subr.mxu0 0.0
    %115 = vmatpush1.msra.mxu0 0.0
    %116 = vmatprep.subr.mxu0 0.0
    %117 = vmatpush1.msra.mxu0 0.0
    %118 = vmatprep.subr.mxu0 0.0
    %119 = vmatpush1.msra.mxu0 0.0
    %120 = vmatprep.subr.mxu0 0.0
    %121 = vmatpush1.msra.mxu0 0.0
    %122 = vmatprep.subr.mxu0 0.0
    %123 = vmatpush1.msra.mxu0 0.0
    %124 = vmatprep.subr.mxu0 0.0
    %125 = vmatpush1.msra.mxu0 0.0
    %126 = vmatprep.subr.mxu0 0.0
    %127 = vmatpush1.msra.mxu0 0.0
    %128 = vmatprep.subr.mxu0 0.0
    %129 = vmatpush1.msra.mxu0 0.0
    %130 = vmatprep.subr.mxu0 0.0
    %131 = vmatpush1.msra.mxu0 0.0
    %132 = vmatprep.subr.mxu0 0.0
    %133 = vmatpush1.msra.mxu0 0.0
    %134 = vmatprep.subr.mxu0 0.0
    %135 = vmatpush1.msra.mxu0 0.0
    %136 = vmatprep.subr.mxu0 0.0
    %137 = vmatpush1.msra.mxu0 0.0
    %138 = vmatprep.subr.mxu0 0.0
    %139 = vmatpush1.msra.mxu0 0.0
    %140 = vmatprep.subr.mxu0 0.0
    %141 = vmatpush1.msra.mxu0 0.0
    %142 = vmatprep.subr.mxu0 0.0
    %143 = vmatpush1.msra.mxu0 0.0
    %144 = vmatprep.subr.mxu0 0.0
    %145 = vmatpush1.msra.mxu0 0.0
    %146 = vmatprep.subr.mxu0 0.0
    %147 = vmatpush1.msra.mxu0 0.0
    %148 = vmatprep.subr.mxu0 0.0
    %149 = vmatpush1.msra.mxu0 0.0
    %150 = vmatprep.subr.mxu0 0.0
    %151 = vmatpush1.msra.mxu0 0.0
    %152 = vmatprep.subr.mxu0 0.0
    %153 = vmatpush1.msra.mxu0 0.0
    %154 = vmatprep.subr.mxu0 0.0
    %155 = vmatpush1.msra.mxu0 0.0
    %156 = vmatprep.subr.mxu0 0.0
    %157 = vmatpush1.msra.mxu0 0.0
    %158 = vmatprep.subr.mxu0 0.0
    %159 = vmatpush1.msra.mxu0 0.0
    %160 = vmatprep.mubr.f32.mxu0 0.0
    %161 = vmatmul.mubr.f32.gmra.mrb[0].mxu0 %v94
    %v162 = vpop.f32.mrb[0].mxu0
    %v163 = vadd.f32 %v90, %v162
    %v164 = vpop.f32.mrb[0].mxu0
    %165 = vdwg.mxu0
    %v166 = vmax.f32 %v163, 0.0
    %v167 = vld [vmem:[#allocation7] sm:$0xff]
    %v168 = vld [vmem:[#allocation7 + $0x8] sm:$0xff]
    %v169 = vld [vmem:[#allocation7 + $0x10] sm:$0xff]
    %v170 = vld [vmem:[#allocation7 + $0x18] sm:$0xff]
    %v171 = vld [vmem:[#allocation7 + $0x20] sm:$0xff]
    %v172 = vld [vmem:[#allocation7 + $0x28] sm:$0xff]
    %v173 = vld [vmem:[#allocation7 + $0x30] sm:$0xff]
    %v174 = vld [vmem:[#allocation7 + $0x38] sm:$0xff]
    %v175 = vld [vmem:[#allocation7 + $0x40] sm:$0xff]
    %v176 = vld [vmem:[#allocation7 + $0x48] sm:$0xff]
    %v177 = vld [vmem:[#allocation7 + $0x50] sm:$0xff]
    %v178 = vld [vmem:[#allocation7 + $0x58] sm:$0xff]
    %v179 = vld [vmem:[#allocation7 + $0x60] sm:$0xff]
    %v180 = vld [vmem:[#allocation7 + $0x68] sm:$0xff]
    %v181 = vld [vmem:[#allocation7 + $0x70] sm:$0xff]
    %v182 = vld [vmem:[#allocation7 + $0x78] sm:$0xff]
    %v183 = vld [vmem:[%s4] sm:$0x1]
    %v185 = vlaneseq
    %v186 = vshrl.u32 %v185, 7
    %v187 = vsub.s32 0, %v186
    %v188 = vrot.slane %v183, %v187
    %190 = vmatprep.subr.mxu0 0.0
    %191 = vmatpush1.msra.mxu0 %v167
    %192 = vmatprep.subr.mxu0 0.0
    %193 = vmatpush1.msra.mxu0 %v168
    %194 = vmatprep.subr.mxu0 0.0
    %195 = vmatpush1.msra.mxu0 %v169
    %196 = vmatprep.subr.mxu0 0.0
    %197 = vmatpush1.msra.mxu0 %v170
    %198 = vmatprep.subr.mxu0 0.0
    %199 = vmatpush1.msra.mxu0 %v171
    %200 = vmatprep.subr.mxu0 0.0
    %201 = vmatpush1.msra.mxu0 %v172
    %202 = vmatprep.subr.mxu0 0.0
    %203 = vmatpush1.msra.mxu0 %v173
    %204 = vmatprep.subr.mxu0 0.0
    %205 = vmatpush1.msra.mxu0 %v174
    %206 = vmatprep.subr.mxu0 0.0
    %207 = vmatpush1.msra.mxu0 %v175
    %208 = vmatprep.subr.mxu0 0.0
    %209 = vmatpush1.msra.mxu0 %v176
    %210 = vmatprep.subr.mxu0 0.0
    %211 = vmatpush1.msra.mxu0 %v177
    %212 = vmatprep.subr.mxu0 0.0
    %213 = vmatpush1.msra.mxu0 %v178
    %214 = vmatprep.subr.mxu0 0.0
    %215 = vmatpush1.msra.mxu0 %v179
    %216 = vmatprep.subr.mxu0 0.0
    %217 = vmatpush1.msra.mxu0 %v180
    %218 = vmatprep.subr.mxu0 0.0
    %219 = vmatpush1.msra.mxu0 %v181
    %220 = vmatprep.subr.mxu0 0.0
    %221 = vmatpush1.msra.mxu0 %v182
    %222 = vmatprep.subr.mxu0 0.0
    %223 = vmatpush1.msra.mxu0 0.0
    %224 = vmatprep.subr.mxu0 0.0
    %225 = vmatpush1.msra.mxu0 0.0
    %226 = vmatprep.subr.mxu0 0.0
    %227 = vmatpush1.msra.mxu0 0.0
    %228 = vmatprep.subr.mxu0 0.0
    %229 = vmatpush1.msra.mxu0 0.0
    %230 = vmatprep.subr.mxu0 0.0
    %231 = vmatpush1.msra.mxu0 0.0
    %232 = vmatprep.subr.mxu0 0.0
    %233 = vmatpush1.msra.mxu0 0.0
    %234 = vmatprep.subr.mxu0 0.0
    %235 = vmatpush1.msra.mxu0 0.0
    %236 = vmatprep.subr.mxu0 0.0
    %237 = vmatpush1.msra.mxu0 0.0
    %238 = vmatprep.subr.mxu0 0.0
    %239 = vmatpush1.msra.mxu0 0.0
    %240 = vmatprep.subr.mxu0 0.0
    %241 = vmatpush1.msra.mxu0 0.0
    %242 = vmatprep.subr.mxu0 0.0
    %243 = vmatpush1.msra.mxu0 0.0
    %244 = vmatprep.subr.mxu0 0.0
    %245 = vmatpush1.msra.mxu0 0.0
    %246 = vmatprep.subr.mxu0 0.0
    %247 = vmatpush1.msra.mxu0 0.0
    %248 = vmatprep.subr.mxu0 0.0
    %249 = vmatpush1.msra.mxu0 0.0
    %250 = vmatprep.subr.mxu0 0.0
    %251 = vmatpush1.msra.mxu0 0.0
    %252 = vmatprep.subr.mxu0 0.0
    %253 = vmatpush1.msra.mxu0 0.0
    %254 = vmatprep.mubr.f32.mxu0 0.0
    %255 = vmatmul.mubr.f32.gmra.mrb[0].mxu0 %v166
    %v256 = vpop.f32.mrb[0].mxu0
    %v257 = vadd.f32 %v188, %v256
    %v258 = vpop.f32.mrb[0].mxu0
    %259 = vdwg.mxu0
    %v260 = vmax.f32 %v257, 0.0
    %v261 = vld [vmem:[#allocation8] sm:$0xff]
    %v262 = vld [vmem:[#allocation8 + $0x8] sm:$0xff]
    %v263 = vld [vmem:[#allocation8 + $0x10] sm:$0xff]
    %v264 = vld [vmem:[#allocation8 + $0x18] sm:$0xff]
    %v265 = vld [vmem:[#allocation8 + $0x20] sm:$0xff]
    %v266 = vld [vmem:[#allocation8 + $0x28] sm:$0xff]
    %v267 = vld [vmem:[#allocation8 + $0x30] sm:$0xff]
    %v268 = vld [vmem:[#allocation8 + $0x38] sm:$0xff]
    %v269 = vld [vmem:[#allocation8 + $0x40] sm:$0xff]
    %v270 = vld [vmem:[#allocation8 + $0x48] sm:$0xff]
    %v271 = vld [vmem:[#allocation8 + $0x50] sm:$0xff]
    %v272 = vld [vmem:[#allocation8 + $0x58] sm:$0xff]
    %v273 = vld [vmem:[#allocation8 + $0x60] sm:$0xff]
    %v274 = vld [vmem:[#allocation8 + $0x68] sm:$0xff]
    %v275 = vld [vmem:[#allocation8 + $0x70] sm:$0xff]
    %v276 = vld [vmem:[#allocation8 + $0x78] sm:$0xff]
    %v277 = vld [vmem:[%s6] sm:$0x1]
    %v279 = vlaneseq
    %v280 = vshrl.u32 %v279, 7
    %v281 = vsub.s32 0, %v280
    %v282 = vrot.slane %v277, %v281
    %284 = vmatprep.subr.mxu0 0.0
    %285 = vmatpush1.msra.mxu0 %v261
    %286 = vmatprep.subr.mxu0 0.0
    %287 = vmatpush1.msra.mxu0 %v262
    %288 = vmatprep.subr.mxu0 0.0
    %289 = vmatpush1.msra.mxu0 %v263
    %290 = vmatprep.subr.mxu0 0.0
    %291 = vmatpush1.msra.mxu0 %v264
    %292 = vmatprep.subr.mxu0 0.0
    %293 = vmatpush1.msra.mxu0 %v265
    %294 = vmatprep.subr.mxu0 0.0
    %295 = vmatpush1.msra.mxu0 %v266
    %296 = vmatprep.subr.mxu0 0.0
    %297 = vmatpush1.msra.mxu0 %v267
    %298 = vmatprep.subr.mxu0 0.0
    %299 = vmatpush1.msra.mxu0 %v268
    %300 = vmatprep.subr.mxu0 0.0
    %301 = vmatpush1.msra.mxu0 %v269
    %302 = vmatprep.subr.mxu0 0.0
    %303 = vmatpush1.msra.mxu0 %v270
    %304 = vmatprep.subr.mxu0 0.0
    %305 = vmatpush1.msra.mxu0 %v271
    %306 = vmatprep.subr.mxu0 0.0
    %307 = vmatpush1.msra.mxu0 %v272
    %308 = vmatprep.subr.mxu0 0.0
    %309 = vmatpush1.msra.mxu0 %v273
    %310 = vmatprep.subr.mxu0 0.0
    %311 = vmatpush1.msra.mxu0 %v274
    %312 = vmatprep.subr.mxu0 0.0
    %313 = vmatpush1.msra.mxu0 %v275
    %314 = vmatprep.subr.mxu0 0.0
    %315 = vmatpush1.msra.mxu0 %v276
    %316 = vmatprep.subr.mxu0 0.0
    %317 = vmatpush1.msra.mxu0 0.0
    %318 = vmatprep.subr.mxu0 0.0
    %319 = vmatpush1.msra.mxu0 0.0
    %320 = vmatprep.subr.mxu0 0.0
    %321 = vmatpush1.msra.mxu0 0.0
    %322 = vmatprep.subr.mxu0 0.0
    %323 = vmatpush1.msra.mxu0 0.0
    %324 = vmatprep.subr.mxu0 0.0
    %325 = vmatpush1.msra.mxu0 0.0
    %326 = vmatprep.subr.mxu0 0.0
    %327 = vmatpush1.msra.mxu0 0.0
    %328 = vmatprep.subr.mxu0 0.0
    %329 = vmatpush1.msra.mxu0 0.0
    %330 = vmatprep.subr.mxu0 0.0
    %331 = vmatpush1.msra.mxu0 0.0
    %332 = vmatprep.subr.mxu0 0.0
    %333 = vmatpush1.msra.mxu0 0.0
    %334 = vmatprep.subr.mxu0 0.0
    %335 = vmatpush1.msra.mxu0 0.0
    %336 = vmatprep.subr.mxu0 0.0
    %337 = vmatpush1.msra.mxu0 0.0
    %338 = vmatprep.subr.mxu0 0.0
    %339 = vmatpush1.msra.mxu0 0.0
    %340 = vmatprep.subr.mxu0 0.0
    %341 = vmatpush1.msra.mxu0 0.0
    %342 = vmatprep.subr.mxu0 0.0
    %343 = vmatpush1.msra.mxu0 0.0
    %344 = vmatprep.subr.mxu0 0.0
    %345 = vmatpush1.msra.mxu0 0.0
    %346 = vmatprep.subr.mxu0 0.0
    %347 = vmatpush1.msra.mxu0 0.0
    %348 = vmatprep.mubr.f32.mxu0 0.0
    %349 = vmatmul.mubr.f32.gmra.mrb[0].mxu0 %v260
    %v350 = vpop.f32.mrb[0].mxu0
    %v351 = vadd.f32 %v282, %v350
    %v352 = vpop.f32.mrb[0].mxu0
    %353 = vdwg.mxu0
    %354 = vst [vmem:[#allocation10] sm:$0xff] %v351
    // Predicated region
    $region46: #{_mlp_fused_impl.1} parent=1 // pred_check
      _
    $region47: #{_mlp_fused_impl.1} parent=1 // pred_check_branch
      %356 = sbr.rel (0) target = $region49
    $region48: #{_mlp_fused_impl.1} parent=1 // pred_region
      %s358 = ssub.s32 128, 128
      %359 = vsyncadd [#allocation4], %s358
      %s361 = sshll.u32 [#allocation10], 4
      %s362 = int_to_ptr.vmem [resolvable:$true] %s361
      %364 = dma.vmem_to_hbm [thread:$0]  %s362, 128, %s7, [#allocation4]
    $region49: #{_mlp_fused_impl.1} parent=1 // pred_fallthru
      _
    // Predicated region
    $region50: #{_mlp_fused_impl.1} parent=1 // pred_check
      _
    $region51: #{_mlp_fused_impl.1} parent=1 // pred_check_branch
      %366 = sbr.rel (0) target = $region53
    $region52: #{_mlp_fused_impl.1} parent=1 // pred_region
      %367 = dma.done [#allocation4], 128
    $region53: #{_mlp_fused_impl.1} parent=1 // pred_fallthru
      _
    %368 = vsyncpa [#allocation3], 1
    %369 = vsyncpa [#allocation6], 1
    %370 = vsyncpa [#allocation9], 1
    %371 = vsyncpa [#allocation4], 1

</llo_original>
